<compile_context>
chip_gen: v5e
topology: v5e:2x2
jax: 0.10.0
libtpu: 0.0.40
codegen_flags: <defaults>
</compile_context>

<pallas_src>
import functools

import jax
import jax.numpy as jnp
from jax.experimental import pallas as pl
from jax.experimental.pallas import tpu as pltpu


_MIB = 1024 * 1024


def _tpu_vmem_capacity_bytes():
    try:
        return int(pltpu.get_tpu_info().vmem_capacity_bytes)
    except Exception:
        return 64 * _MIB  # conservative default (v7x per-TC physical)


_VMEM_CAP = _tpu_vmem_capacity_bytes()
# v5e/v6e (128 MiB physical): ~48 MiB scoped; v7x (64 MiB physical): 32 MiB.
_VMEM_LIMIT = int(min(96 * _MIB, max(32 * _MIB, (3 * _VMEM_CAP) // 8)))
_CONV_TM_TARGET = 512
_BN_TM_TARGET = 1024 if _VMEM_CAP >= 96 * _MIB else 512


def _round_up(x, m):
    return ((x + m - 1) // m) * m


def _pick_tile(dim, align, target):
    """Largest divisor of `dim` that is a multiple of `align` and <= target."""
    assert dim % align == 0
    best = align
    t = align
    while t <= min(dim, target):
        if dim % t == 0:
            best = t
        t += align
    return best


def _pad_m(M, target):
    """(M_pad, tm): pad M so the lane tile is the full target (or all of a
    small M), never a degraded 128/256-lane tile."""
    if M <= target:
        mp = _round_up(M, 128)
        return mp, mp
    return _round_up(M, target), target


# ----------------------------- Pallas kernels -----------------------------

def _conv_bn_kernel_1k(w_ref, p_ref, y_ref, sum_ref, sq_ref):
    """Single-K-step conv tile with fused BN statistics.

    w_ref:  (1, CB, K)    weight tile (resident across M tiles)
    p_ref:  (1, K, TM)    im2col patch tile
    y_ref:  (1, CB, TM)   conv output tile (lane-dense)
    sum_ref/sq_ref: (1, 1, CB, 1) per-(group, M-tile) partial BN stats
    """
    out = jnp.dot(w_ref[0], p_ref[0], preferred_element_type=jnp.float32)
    y_ref[0] = out.astype(y_ref.dtype)
    sum_ref[0, 0] = jnp.sum(out, axis=1, keepdims=True)
    sq_ref[0, 0] = jnp.sum(out * out, axis=1, keepdims=True)


def _conv_bn_kernel_mk(w_ref, p_ref, y_ref, sum_ref, sq_ref, acc_ref):
    """K-tiled variant: f32 VMEM accumulator, output+stats written at last K."""
    k = pl.program_id(2)

    @pl.when(k == 0)
    def _():
        acc_ref[...] = jnp.zeros_like(acc_ref)

    acc_ref[...] += jnp.dot(w_ref[0], p_ref[0],
                            preferred_element_type=jnp.float32)

    @pl.when(k == pl.num_programs(2) - 1)
    def _():
        out = acc_ref[...]
        y_ref[0] = out.astype(y_ref.dtype)
        sum_ref[0, 0] = jnp.sum(out, axis=1, keepdims=True)
        sq_ref[0, 0] = jnp.sum(out * out, axis=1, keepdims=True)


def _bn_affine_kernel(x_ref, s_ref, t_ref, o_ref, *, relu):
    y = x_ref[...].astype(jnp.float32) * s_ref[...] + t_ref[...]
    if relu:
        y = jnp.maximum(y, 0.0)
    o_ref[...] = y.astype(o_ref.dtype)


def _bn_affine_add_kernel(x_ref, r_ref, s_ref, t_ref, rs_ref, rt_ref, o_ref, *,
                          relu):
    # bn2(x) + bn_shortcut(residual), both BNs folded to affine, optional ReLU.
    y = x_ref[...].astype(jnp.float32) * s_ref[...] + t_ref[...]
    y = y + r_ref[...].astype(jnp.float32) * rs_ref[...] + rt_ref[...]
    if relu:
        y = jnp.maximum(y, 0.0)
    o_ref[...] = y.astype(o_ref.dtype)


# ------------------------------ wrappers -----------------------------------

def conv_bn(x_cm, M_in, spatial, w, gamma, beta, *, stride, padding, groups,
            compute_dtype, store_dtype, eps=1e-5):
    """Grouped Conv2d (bias=False) on channels-major activations with the
    training-mode BatchNorm statistics fused into the conv epilogue.

    x_cm: [Cin, >= M_in], M ordered (N, H, W); only first M_in columns are
    real (the rest is lane padding from an upstream kernel).
    Returns (y_pad [Cout, M_pad] store_dtype, scale [Cout,1], shift [Cout,1],
             (N, Ho, Wo), M_out, M_pad).
    """
    N, H, W = spatial
    Cin = x_cm.shape[0]
    Cout, cin_g, kh, kw = w.shape
    assert Cin == cin_g * groups and Cout % groups == 0
    cout_g = Cout // groups
    Ho = (H + 2 * padding - kh) // stride + 1
    Wo = (W + 2 * padding - kw) // stride + 1
    M = N * Ho * Wo

    # Cast BEFORE the kh*kw replication so the im2col tensor is materialized
    # and streamed in compute_dtype (halves its HBM traffic in bf16 mode).
    xs = x_cm[:, :M_in].astype(compute_dtype).reshape(Cin, N, H, W)
    # TODO(synk): fold the im2col into the conv kernel (shifted in-kernel
    # windows / manual DMA) so the replicated patch tensor never hits HBM.
    xp = jnp.pad(xs, ((0, 0), (0, 0), (padding, padding), (padding, padding)))
    cols = []
    for i in range(kh):
        for j in range(kw):
            cols.append(xp[:, :, i:i + stride * (Ho - 1) + 1:stride,
                           j:j + stride * (Wo - 1) + 1:stride])
    patches = jnp.stack(cols, axis=1)                   # [Cin, kh*kw, N, Ho, Wo]

    # Per-group K padded so bf16 sublane packing never forces a relayout.
    k_align = 16 if compute_dtype == jnp.bfloat16 else 8
    Kg = cin_g * kh * kw
    Kg_pad = _round_up(Kg, k_align)
    patches = patches.reshape(groups, Kg, M)            # K order = (cin_g, kh, kw)
    wg = w.astype(compute_dtype).reshape(groups, cout_g, Kg)
    if Kg_pad != Kg:
        patches = jnp.pad(patches, ((0, 0), (0, Kg_pad - Kg), (0, 0)))
        wg = jnp.pad(wg, ((0, 0), (0, 0), (0, Kg_pad - Kg)))

    # Packed-ensemble groups are tiny: batch all groups into one block-diagonal
    # matmul (better MXU fill, no per-group serial grid).  Large-channel convs
    # keep the per-group grid.
    blockdiag = cout_g < 128 and groups <= 8
    if blockdiag:
        idx = jnp.arange(groups)
        wbd = jnp.zeros((groups, cout_g, groups, Kg_pad), wg.dtype)
        wbd = wbd.at[idx, :, idx, :].set(wg)
        wk = wbd.reshape(1, Cout, groups * Kg_pad)
        pk = patches.reshape(1, groups * Kg_pad, M)
        GB, CB, Kd = 1, Cout, groups * Kg_pad
    else:
        wk, pk = wg, patches
        GB, CB, Kd = groups, cout_g, Kg_pad

    # Lane padding: always pad M up to a multiple of the target tile.
    M_pad, tm = _pad_m(M, _CONV_TM_TARGET)
    if M_pad != M:
        pk = jnp.pad(pk, ((0, 0), (0, 0), (0, M_pad - M)))
    MT = M_pad // tm

    # Tile K only when it is genuinely large (weight tile lane dim must then
    # be a multiple of 128).
    if Kd > 2048:
        tk = 512
        Kd_pad = _round_up(Kd, tk)
        if Kd_pad != Kd:
            wk = jnp.pad(wk, ((0, 0), (0, 0), (0, Kd_pad - Kd)))
            pk = jnp.pad(pk, ((0, 0), (0, Kd_pad - Kd), (0, 0)))
        Kd = Kd_pad
        KT = Kd // tk
    else:
        tk = Kd
        KT = 1

    out_shapes = (
        jax.ShapeDtypeStruct((GB, CB, M_pad), store_dtype),
        jax.ShapeDtypeStruct((GB, MT, CB, 1), jnp.float32),
        jax.ShapeDtypeStruct((GB, MT, CB, 1), jnp.float32),
    )
    if KT == 1:
        y_pad, psum, psq = pl.pallas_call(
            _conv_bn_kernel_1k,
            out_shape=out_shapes,
            grid=(GB, MT),
            in_specs=[
                pl.BlockSpec((1, CB, tk), lambda g, mi: (g, 0, 0)),
                pl.BlockSpec((1, tk, tm), lambda g, mi: (g, 0, mi)),
            ],
            out_specs=(
                pl.BlockSpec((1, CB, tm), lambda g, mi: (g, 0, mi)),
                pl.BlockSpec((1, 1, CB, 1), lambda g, mi: (g, mi, 0, 0)),
                pl.BlockSpec((1, 1, CB, 1), lambda g, mi: (g, mi, 0, 0)),
            ),
            compiler_params=pltpu.CompilerParams(
                dimension_semantics=("parallel", "parallel"),
                vmem_limit_bytes=_VMEM_LIMIT),
        )(wk, pk)
    else:
        y_pad, psum, psq = pl.pallas_call(
            _conv_bn_kernel_mk,
            out_shape=out_shapes,
            grid=(GB, MT, KT),
            in_specs=[
                pl.BlockSpec((1, CB, tk), lambda g, mi, ki: (g, 0, ki)),
                pl.BlockSpec((1, tk, tm), lambda g, mi, ki: (g, ki, mi)),
            ],
            out_specs=(
                pl.BlockSpec((1, CB, tm), lambda g, mi, ki: (g, 0, mi)),
                pl.BlockSpec((1, 1, CB, 1), lambda g, mi, ki: (g, mi, 0, 0)),
                pl.BlockSpec((1, 1, CB, 1), lambda g, mi, ki: (g, mi, 0, 0)),
            ),
            scratch_shapes=[pltpu.VMEM((CB, tm), jnp.float32)],
            compiler_params=pltpu.CompilerParams(
                dimension_semantics=("parallel", "parallel", "arbitrary"),
                vmem_limit_bytes=_VMEM_LIMIT),
        )(wk, pk)

    y_pad = y_pad.reshape(Cout, M_pad)

    # Tiny (C,)-sized BN finalization in XLA; lane-padded columns are exactly
    # zero so they contribute nothing to either partial sum; divide by true M.
    ssum = psum.sum(axis=1).reshape(Cout, 1)
    ssq = psq.sum(axis=1).reshape(Cout, 1)
    mean = ssum / M
    # NOTE: E[x^2]-E[x]^2 in f32 — adequate for post-conv activations here;
    # switch to shifted-mean accumulation if activation magnitudes grow large.
    var = jnp.maximum(ssq / M - mean * mean, 0.0)
    scale = gamma.reshape(Cout, 1).astype(jnp.float32) * jax.lax.rsqrt(var + eps)
    shift = beta.reshape(Cout, 1).astype(jnp.float32) - mean * scale
    return y_pad, scale, shift, (N, Ho, Wo), M, M_pad


def bn_affine(x_pad, scale, shift, *, relu, out_dtype, residual=None,
              res_scale=None, res_shift=None):
    """Tiled per-channel affine (+ fused shortcut affine + residual add)(+ReLU).

    Operates directly on lane-padded (C, M_pad) buffers from conv_bn — no
    slice / re-pad HBM round trips between kernels.
    """
    C, M_pad = x_pad.shape
    tm = _pick_tile(M_pad, 128, _BN_TM_TARGET)
    cp = pltpu.CompilerParams(dimension_semantics=("parallel",),
                              vmem_limit_bytes=_VMEM_LIMIT)
    full = pl.BlockSpec((C, tm), lambda mi: (0, mi))
    vec = pl.BlockSpec((C, 1), lambda mi: (0, 0))

    if residual is None:
        return pl.pallas_call(
            functools.partial(_bn_affine_kernel, relu=relu),
            out_shape=jax.ShapeDtypeStruct((C, M_pad), out_dtype),
            grid=(M_pad // tm,),
            in_specs=[full, vec, vec],
            out_specs=full,
            compiler_params=cp,
        )(x_pad, scale, shift)

    assert residual.shape == (C, M_pad)
    return pl.pallas_call(
        functools.partial(_bn_affine_add_kernel, relu=relu),
        out_shape=jax.ShapeDtypeStruct((C, M_pad), out_dtype),
        grid=(M_pad // tm,),
        in_specs=[full, pl.BlockSpec((C, tm), lambda mi: (0, mi)),
                  vec, vec, vec, vec],
        out_specs=full,
        compiler_params=cp,
    )(x_pad, residual, scale, shift, res_scale, res_shift)


# --------------------------- BasicBlock forward -----------------------------

def basic_block_forward(x, params, *, stride, gamma_g, n_estimators, downsample,
                        compute_dtype=jnp.float32):
    store_dtype = compute_dtype      # bf16 inter-kernel activations in bf16 mode
    N, Cin, H, W = x.shape
    M0 = N * H * W
    # Single layout conversion at the block boundary: NCHW -> [C, N*H*W].
    x_cm = x.transpose(1, 0, 2, 3).reshape(Cin, M0)

    # conv1 (groups = n_estimators) with fused bn1 stats, then bn1+relu.
    y1, s1, t1, sp1, M1, _ = conv_bn(
        x_cm, M0, (N, H, W), params["w1"], params["g1"], params["b1"],
        stride=stride, padding=1, groups=n_estimators,
        compute_dtype=compute_dtype, store_dtype=store_dtype)
    a1 = bn_affine(y1, s1, t1, relu=True, out_dtype=store_dtype)

    # conv2 (groups = gamma * n_estimators, stride 1) with fused bn2 stats.
    y2, s2, t2, _, M2, Mp2 = conv_bn(
        a1, M1, sp1, params["w2"], params["g2"], params["b2"],
        stride=1, padding=1, groups=gamma_g * n_estimators,
        compute_dtype=compute_dtype, store_dtype=store_dtype)
    Cout = y2.shape[0]

    # Shortcut branch.
    if downsample:
        yd, sd, td, _, Md, Mpd = conv_bn(
            x_cm, M0, (N, H, W), params["wd"], params["gd"], params["bd"],
            stride=stride, padding=0, groups=gamma_g * n_estimators,
            compute_dtype=compute_dtype, store_dtype=store_dtype)
        assert Md == M2 and Mpd == Mp2
        res, rs, rt = yd, sd, td
    else:
        assert stride == 1 and Cin == Cout, \
            "identity shortcut requires stride == 1 and Cin == Cout"
        res = x_cm if Mp2 == M0 else jnp.pad(x_cm, ((0, 0), (0, Mp2 - M0)))
        rs = jnp.ones((Cout, 1), jnp.float32)
        rt = jnp.zeros((Cout, 1), jnp.float32)

    # bn2 + shortcut-BN affine + residual add + relu fused in one tiled pass.
    out_p = bn_affine(y2, s2, t2, relu=True, out_dtype=jnp.float32,
                      residual=res, res_scale=rs, res_shift=rt)

    N1, H1, W1 = sp1
    out_cm = out_p[:, :M2]
    return out_cm.reshape(Cout, N1, H1, W1).transpose(1, 0, 2, 3)


# ------------------------------- reference ---------------------------------

def _ref_conv(x, w, stride, padding, groups):
    return jax.lax.conv_general_dilated(
        x, w, (stride, stride), [(padding, padding), (padding, padding)],
        dimension_numbers=("NCHW", "OIHW", "NCHW"), feature_group_count=groups)


def _ref_bn(x, g, b, eps=1e-5):
    mean = x.mean(axis=(0, 2, 3), keepdims=True)
    var = jnp.square(x - mean).mean(axis=(0, 2, 3), keepdims=True)
    return (x - mean) * jax.lax.rsqrt(var + eps) * g.reshape(1, -1, 1, 1) \
        + b.reshape(1, -1, 1, 1)


def _ref_forward(x, p, *, stride, gamma_g, n_estimators, downsample):
    out = _ref_conv(x, p["w1"], stride, 1, n_estimators)
    out = jnp.maximum(_ref_bn(out, p["g1"], p["b1"]), 0.0)
    out = _ref_conv(out, p["w2"], 1, 1, gamma_g * n_estimators)
    out = _ref_bn(out, p["g2"], p["b2"])
    if downsample:
        sc = _ref_conv(x, p["wd"], stride, 0, gamma_g * n_estimators)
        sc = _ref_bn(sc, p["gd"], p["bd"])
    else:
        sc = x
    return jnp.maximum(out + sc, 0.0)


# --------------------------------- main -------------------------------------

if __name__ == "__main__":
    def make_params(key, real_in, real_out, g1, g2, ksize, downsample):
        k = jax.random.split(key, 10)
        p = {
            "w1": 0.1 * jax.random.normal(
                k[1], (real_out, real_in // g1, ksize, ksize), jnp.float32),
            "g1": 1.0 + 0.1 * jax.random.normal(k[2], (real_out,), jnp.float32),
            "b1": 0.1 * jax.random.normal(k[3], (real_out,), jnp.float32),
            "w2": 0.1 * jax.random.normal(
                k[4], (real_out, real_out // g2, ksize, ksize), jnp.float32),
            "g2": 1.0 + 0.1 * jax.random.normal(k[5], (real_out,), jnp.float32),
            "b2": 0.1 * jax.random.normal(k[6], (real_out,), jnp.float32),
        }
        if downsample:
            p["wd"] = 0.1 * jax.random.normal(
                k[7], (real_out, real_in // g2, 1, 1), jnp.float32)
            p["gd"] = 1.0 + 0.05 * jax.random.normal(k[8], (real_out,), jnp.float32)
            p["bd"] = 0.05 * jax.random.normal(k[9], (real_out,), jnp.float32)
        return p

    # BasicBlock(in=4, out=4, k=3, stride=2, alpha=2, gamma=2, n_estimators=2,
    #            downsample=True)  -> real_in = real_out = 8, groups = (2, 4)
    key = jax.random.PRNGKey(0)
    N, H, W = 2, 16, 16
    real_in, real_out = 8, 8
    stride, gamma_g, n_estimators = 2, 2, 2

    kx, kp = jax.random.split(key)
    x = jax.random.normal(kx, (N, real_in, H, W), dtype=jnp.float32)
    params = make_params(kp, real_in, real_out, n_estimators,
                         gamma_g * n_estimators, 3, downsample=True)

    ref = _ref_forward(x, params, stride=stride, gamma_g=gamma_g,
                       n_estimators=n_estimators, downsample=True)

    # f32 MXU operands / f32 storage: strict check.
    fwd_f32 = jax.jit(functools.partial(
        basic_block_forward, stride=stride, gamma_g=gamma_g,
        n_estimators=n_estimators, downsample=True, compute_dtype=jnp.float32))
    out = jax.block_until_ready(fwd_f32(x, params))
    assert out.shape == ref.shape == (N, real_out, H // stride, W // stride)
    err = float(jnp.max(jnp.abs(out - ref)))
    assert err < 1e-4, f"f32 path error {err}"

    # bf16 MXU operands + bf16 inter-kernel activations: loose check.
    fwd_bf16 = jax.jit(functools.partial(
        basic_block_forward, stride=stride, gamma_g=gamma_g,
        n_estimators=n_estimators, downsample=True, compute_dtype=jnp.bfloat16))
    out_bf = jax.block_until_ready(fwd_bf16(x, params))
    err_bf = float(jnp.max(jnp.abs(out_bf - ref)))
    assert err_bf < 0.25, f"bf16 path error {err_bf}"

    # Identity-shortcut config (stride=1, downsample=False).
    kx2, kp2 = jax.random.split(jax.random.PRNGKey(1))
    x2 = jax.random.normal(kx2, (N, real_in, H, W), dtype=jnp.float32)
    params2 = make_params(kp2, real_in, real_out, n_estimators,
                          gamma_g * n_estimators, 3, downsample=False)
    fwd_id = jax.jit(functools.partial(
        basic_block_forward, stride=1, gamma_g=gamma_g,
        n_estimators=n_estimators, downsample=False, compute_dtype=jnp.float32))
    out2 = jax.block_until_ready(fwd_id(x2, params2))
    ref2 = _ref_forward(x2, params2, stride=1, gamma_g=gamma_g,
                        n_estimators=n_estimators, downsample=False)
    err2 = float(jnp.max(jnp.abs(out2 - ref2)))
    assert out2.shape == ref2.shape == (N, real_out, H, W)
    assert err2 < 1e-4, f"identity path error {err2}"

    print("KERNEL_OK")
</pallas_src>

<mosaic_0001>
module attributes {stable_mosaic.version = 11 : i64} {
  func.func @_conv_bn_kernel_1k(%arg0: i32, %arg1: i32, %arg2: memref<1x8x80xf32, #tpu.memory_space<vmem>>, %arg3: memref<1x80x128xf32, #tpu.memory_space<vmem>>, %arg4: memref<1x8x128xf32, #tpu.memory_space<vmem>>, %arg5: memref<1x1x8x1xf32, #tpu.memory_space<vmem>>, %arg6: memref<1x1x8x1xf32, #tpu.memory_space<vmem>>) attributes {dimension_semantics = [#tpu.dimension_semantics<parallel>, #tpu.dimension_semantics<parallel>], iteration_bounds = array<i64: 1, 1>, scalar_prefetch = 0 : i64, scratch_operands = 0 : i64, tpu.core_type = #tpu.core_type<tc>, window_params = [{transform_indices = @transform_0, window_bounds = array<i64: 1, 8, 80>}, {transform_indices = @transform_1, window_bounds = array<i64: 1, 80, 128>}, {transform_indices = @transform_2, window_bounds = array<i64: 1, 8, 128>}, {transform_indices = @transform_3, window_bounds = array<i64: 1, 1, 8, 1>}, {transform_indices = @transform_4, window_bounds = array<i64: 1, 1, 8, 1>}]} {
    %c0 = arith.constant 0 : index
    %c0_0 = arith.constant 0 : index
    %c0_1 = arith.constant 0 : index
    %0 = vector.load %arg2[%c0, %c0_0, %c0_1] : memref<1x8x80xf32, #tpu.memory_space<vmem>>, vector<1x8x80xf32>
    %1 = vector.shape_cast %0 : vector<1x8x80xf32> to vector<8x80xf32>
    %c0_2 = arith.constant 0 : index
    %c0_3 = arith.constant 0 : index
    %c0_4 = arith.constant 0 : index
    %2 = vector.load %arg3[%c0_2, %c0_3, %c0_4] : memref<1x80x128xf32, #tpu.memory_space<vmem>>, vector<1x80x128xf32>
    %3 = vector.shape_cast %2 : vector<1x80x128xf32> to vector<80x128xf32>
    %cst = arith.constant dense<0.000000e+00> : vector<8x128xf32>
    %4 = tpu.matmul %1, %3, %cst {dimension_numbers = #tpu.dot_dimension_numbers<[1], [0], [0], [1], [0, 0, 1, 1], [], []>} : vector<8x80xf32>, vector<80x128xf32>, vector<8x128xf32> -> vector<8x128xf32>
    %c0_5 = arith.constant 0 : index
    %c0_6 = arith.constant 0 : index
    %c0_7 = arith.constant 0 : index
    %5 = vector.load %arg4[%c0_5, %c0_6, %c0_7] : memref<1x8x128xf32, #tpu.memory_space<vmem>>, vector<1x8x128xf32>
    %6 = vector.shape_cast %5 : vector<1x8x128xf32> to vector<8x128xf32>
    %7 = vector.shape_cast %4 : vector<8x128xf32> to vector<1x8x128xf32>
    tpu.vector_store %arg4[%c0_5, %c0_6, %c0_7], %7 {strides = array<i32>} : memref<1x8x128xf32, #tpu.memory_space<vmem>>, vector<1x8x128xf32>,
    %cst_8 = arith.constant dense<0.000000e+00> : vector<8xf32>
    %8 = vector.multi_reduction <add>, %4, %cst_8 [1] : vector<8x128xf32> to vector<8xf32>
    %9 = vector.shape_cast %8 : vector<8xf32> to vector<8x1xf32>
    %c0_9 = arith.constant 0 : index
    %c0_10 = arith.constant 0 : index
    %c0_11 = arith.constant 0 : index
    %c0_12 = arith.constant 0 : index
    %10 = vector.load %arg5[%c0_9, %c0_10, %c0_11, %c0_12] : memref<1x1x8x1xf32, #tpu.memory_space<vmem>>, vector<1x1x8x1xf32>
    %11 = vector.shape_cast %10 : vector<1x1x8x1xf32> to vector<8x1xf32>
    %12 = vector.shape_cast %9 : vector<8x1xf32> to vector<1x1x8x1xf32>
    tpu.vector_store %arg5[%c0_9, %c0_10, %c0_11, %c0_12], %12 {strides = array<i32>} : memref<1x1x8x1xf32, #tpu.memory_space<vmem>>, vector<1x1x8x1xf32>,
    %13 = arith.mulf %4, %4 : vector<8x128xf32>
    %cst_13 = arith.constant dense<0.000000e+00> : vector<8xf32>
    %14 = vector.multi_reduction <add>, %13, %cst_13 [1] : vector<8x128xf32> to vector<8xf32>
    %15 = vector.shape_cast %14 : vector<8xf32> to vector<8x1xf32>
    %c0_14 = arith.constant 0 : index
    %c0_15 = arith.constant 0 : index
    %c0_16 = arith.constant 0 : index
    %c0_17 = arith.constant 0 : index
    %16 = vector.load %arg6[%c0_14, %c0_15, %c0_16, %c0_17] : memref<1x1x8x1xf32, #tpu.memory_space<vmem>>, vector<1x1x8x1xf32>
    %17 = vector.shape_cast %16 : vector<1x1x8x1xf32> to vector<8x1xf32>
    %18 = vector.shape_cast %15 : vector<8x1xf32> to vector<1x1x8x1xf32>
    tpu.vector_store %arg6[%c0_14, %c0_15, %c0_16, %c0_17], %18 {strides = array<i32>} : memref<1x1x8x1xf32, #tpu.memory_space<vmem>>, vector<1x1x8x1xf32>,
    return
  }
  func.func @transform_0(%arg0: i32, %arg1: i32) -> (i32, i32, i32) {
    %c0_i32 = arith.constant 0 : i32
    %c0_i32_0 = arith.constant 0 : i32
    %c0_i32_1 = arith.constant 0 : i32
    return %arg0, %c0_i32, %c0_i32_0 : i32, i32, i32
  }
  func.func @transform_1(%arg0: i32, %arg1: i32) -> (i32, i32, i32) {
    %c0_i32 = arith.constant 0 : i32
    %c0_i32_0 = arith.constant 0 : i32
    return %arg0, %c0_i32, %arg1 : i32, i32, i32
  }
  func.func @transform_2(%arg0: i32, %arg1: i32) -> (i32, i32, i32) {
    %c0_i32 = arith.constant 0 : i32
    %c0_i32_0 = arith.constant 0 : i32
    return %arg0, %c0_i32, %arg1 : i32, i32, i32
  }
  func.func @transform_3(%arg0: i32, %arg1: i32) -> (i32, i32, i32, i32) {
    %c0_i32 = arith.constant 0 : i32
    %c0_i32_0 = arith.constant 0 : i32
    %c0_i32_1 = arith.constant 0 : i32
    return %arg0, %arg1, %c0_i32, %c0_i32_0 : i32, i32, i32, i32
  }
  func.func @transform_4(%arg0: i32, %arg1: i32) -> (i32, i32, i32, i32) {
    %c0_i32 = arith.constant 0 : i32
    %c0_i32_0 = arith.constant 0 : i32
    %c0_i32_1 = arith.constant 0 : i32
    return %arg0, %arg1, %c0_i32, %c0_i32_0 : i32, i32, i32, i32
  }
}

module attributes {stable_mosaic.version = 11 : i64} {
  func.func @_bn_affine_kernel(%arg0: i32, %arg1: memref<8x128xf32, #tpu.memory_space<vmem>>, %arg2: memref<8x1xf32, #tpu.memory_space<vmem>>, %arg3: memref<8x1xf32, #tpu.memory_space<vmem>>, %arg4: memref<8x128xf32, #tpu.memory_space<vmem>>) attributes {dimension_semantics = [#tpu.dimension_semantics<parallel>], iteration_bounds = array<i64: 1>, scalar_prefetch = 0 : i64, scratch_operands = 0 : i64, tpu.core_type = #tpu.core_type<tc>, window_params = [{transform_indices = @transform_0, window_bounds = array<i64: 8, 128>}, {pipeline_mode = #tpu.pipeline_mode<synchronous>, transform_indices = @transform_1, window_bounds = array<i64: 8, 1>}, {pipeline_mode = #tpu.pipeline_mode<synchronous>, transform_indices = @transform_2, window_bounds = array<i64: 8, 1>}, {transform_indices = @transform_3, window_bounds = array<i64: 8, 128>}]} {
    %c0 = arith.constant 0 : index
    %c0_0 = arith.constant 0 : index
    %0 = vector.load %arg1[%c0, %c0_0] : memref<8x128xf32, #tpu.memory_space<vmem>>, vector<8x128xf32>
    %c0_1 = arith.constant 0 : index
    %c0_2 = arith.constant 0 : index
    %1 = vector.load %arg2[%c0_1, %c0_2] : memref<8x1xf32, #tpu.memory_space<vmem>>, vector<8x1xf32>
    %2 = vector.broadcast %1 : vector<8x1xf32> to vector<8x128xf32>
    %3 = arith.mulf %0, %2 : vector<8x128xf32>
    %c0_3 = arith.constant 0 : index
    %c0_4 = arith.constant 0 : index
    %4 = vector.load %arg3[%c0_3, %c0_4] : memref<8x1xf32, #tpu.memory_space<vmem>>, vector<8x1xf32>
    %5 = vector.broadcast %4 : vector<8x1xf32> to vector<8x128xf32>
    %6 = arith.addf %3, %5 : vector<8x128xf32>
    %cst = arith.constant 0.000000e+00 : f32
    %7 = vector.broadcast %cst : f32 to vector<8x128xf32>
    %8 = arith.maximumf %6, %7 : vector<8x128xf32>
    %c0_5 = arith.constant 0 : index
    %c0_6 = arith.constant 0 : index
    %9 = vector.load %arg4[%c0_5, %c0_6] : memref<8x128xf32, #tpu.memory_space<vmem>>, vector<8x128xf32>
    tpu.vector_store %arg4[%c0_5, %c0_6], %8 {strides = array<i32>} : memref<8x128xf32, #tpu.memory_space<vmem>>, vector<8x128xf32>,
    return
  }
  func.func @transform_0(%arg0: i32) -> (i32, i32) {
    %c0_i32 = arith.constant 0 : i32
    %c0_i32_0 = arith.constant 0 : i32
    return %c0_i32, %arg0 : i32, i32
  }
  func.func @transform_1(%arg0: i32) -> (i32, i32) {
    %c0_i32 = arith.constant 0 : i32
    %c0_i32_0 = arith.constant 0 : i32
    %c0_i32_1 = arith.constant 0 : i32
    return %c0_i32, %c0_i32_0 : i32, i32
  }
  func.func @transform_2(%arg0: i32) -> (i32, i32) {
    %c0_i32 = arith.constant 0 : i32
    %c0_i32_0 = arith.constant 0 : i32
    %c0_i32_1 = arith.constant 0 : i32
    return %c0_i32, %c0_i32_0 : i32, i32
  }
  func.func @transform_3(%arg0: i32) -> (i32, i32) {
    %c0_i32 = arith.constant 0 : i32
    %c0_i32_0 = arith.constant 0 : i32
    return %c0_i32, %arg0 : i32, i32
  }
}

module attributes {stable_mosaic.version = 11 : i64} {
  func.func @_conv_bn_kernel_1k(%arg0: i32, %arg1: i32, %arg2: memref<1x8x96xf32, #tpu.memory_space<vmem>>, %arg3: memref<1x96x128xf32, #tpu.memory_space<vmem>>, %arg4: memref<1x8x128xf32, #tpu.memory_space<vmem>>, %arg5: memref<1x1x8x1xf32, #tpu.memory_space<vmem>>, %arg6: memref<1x1x8x1xf32, #tpu.memory_space<vmem>>) attributes {dimension_semantics = [#tpu.dimension_semantics<parallel>, #tpu.dimension_semantics<parallel>], iteration_bounds = array<i64: 1, 1>, scalar_prefetch = 0 : i64, scratch_operands = 0 : i64, tpu.core_type = #tpu.core_type<tc>, window_params = [{transform_indices = @transform_0, window_bounds = array<i64: 1, 8, 96>}, {transform_indices = @transform_1, window_bounds = array<i64: 1, 96, 128>}, {transform_indices = @transform_2, window_bounds = array<i64: 1, 8, 128>}, {transform_indices = @transform_3, window_bounds = array<i64: 1, 1, 8, 1>}, {transform_indices = @transform_4, window_bounds = array<i64: 1, 1, 8, 1>}]} {
    %c0 = arith.constant 0 : index
    %c0_0 = arith.constant 0 : index
    %c0_1 = arith.constant 0 : index
    %0 = vector.load %arg2[%c0, %c0_0, %c0_1] : memref<1x8x96xf32, #tpu.memory_space<vmem>>, vector<1x8x96xf32>
    %1 = vector.shape_cast %0 : vector<1x8x96xf32> to vector<8x96xf32>
    %c0_2 = arith.constant 0 : index
    %c0_3 = arith.constant 0 : index
    %c0_4 = arith.constant 0 : index
    %2 = vector.load %arg3[%c0_2, %c0_3, %c0_4] : memref<1x96x128xf32, #tpu.memory_space<vmem>>, vector<1x96x128xf32>
    %3 = vector.shape_cast %2 : vector<1x96x128xf32> to vector<96x128xf32>
    %cst = arith.constant dense<0.000000e+00> : vector<8x128xf32>
    %4 = tpu.matmul %1, %3, %cst {dimension_numbers = #tpu.dot_dimension_numbers<[1], [0], [0], [1], [0, 0, 1, 1], [], []>} : vector<8x96xf32>, vector<96x128xf32>, vector<8x128xf32> -> vector<8x128xf32>
    %c0_5 = arith.constant 0 : index
    %c0_6 = arith.constant 0 : index
    %c0_7 = arith.constant 0 : index
    %5 = vector.load %arg4[%c0_5, %c0_6, %c0_7] : memref<1x8x128xf32, #tpu.memory_space<vmem>>, vector<1x8x128xf32>
    %6 = vector.shape_cast %5 : vector<1x8x128xf32> to vector<8x128xf32>
    %7 = vector.shape_cast %4 : vector<8x128xf32> to vector<1x8x128xf32>
    tpu.vector_store %arg4[%c0_5, %c0_6, %c0_7], %7 {strides = array<i32>} : memref<1x8x128xf32, #tpu.memory_space<vmem>>, vector<1x8x128xf32>,
    %cst_8 = arith.constant dense<0.000000e+00> : vector<8xf32>
    %8 = vector.multi_reduction <add>, %4, %cst_8 [1] : vector<8x128xf32> to vector<8xf32>
    %9 = vector.shape_cast %8 : vector<8xf32> to vector<8x1xf32>
    %c0_9 = arith.constant 0 : index
    %c0_10 = arith.constant 0 : index
    %c0_11 = arith.constant 0 : index
    %c0_12 = arith.constant 0 : index
    %10 = vector.load %arg5[%c0_9, %c0_10, %c0_11, %c0_12] : memref<1x1x8x1xf32, #tpu.memory_space<vmem>>, vector<1x1x8x1xf32>
    %11 = vector.shape_cast %10 : vector<1x1x8x1xf32> to vector<8x1xf32>
    %12 = vector.shape_cast %9 : vector<8x1xf32> to vector<1x1x8x1xf32>
    tpu.vector_store %arg5[%c0_9, %c0_10, %c0_11, %c0_12], %12 {strides = array<i32>} : memref<1x1x8x1xf32, #tpu.memory_space<vmem>>, vector<1x1x8x1xf32>,
    %13 = arith.mulf %4, %4 : vector<8x128xf32>
    %cst_13 = arith.constant dense<0.000000e+00> : vector<8xf32>
    %14 = vector.multi_reduction <add>, %13, %cst_13 [1] : vector<8x128xf32> to vector<8xf32>
    %15 = vector.shape_cast %14 : vector<8xf32> to vector<8x1xf32>
    %c0_14 = arith.constant 0 : index
    %c0_15 = arith.constant 0 : index
    %c0_16 = arith.constant 0 : index
    %c0_17 = arith.constant 0 : index
    %16 = vector.load %arg6[%c0_14, %c0_15, %c0_16, %c0_17] : memref<1x1x8x1xf32, #tpu.memory_space<vmem>>, vector<1x1x8x1xf32>
    %17 = vector.shape_cast %16 : vector<1x1x8x1xf32> to vector<8x1xf32>
    %18 = vector.shape_cast %15 : vector<8x1xf32> to vector<1x1x8x1xf32>
    tpu.vector_store %arg6[%c0_14, %c0_15, %c0_16, %c0_17], %18 {strides = array<i32>} : memref<1x1x8x1xf32, #tpu.memory_space<vmem>>, vector<1x1x8x1xf32>,
    return
  }
  func.func @transform_0(%arg0: i32, %arg1: i32) -> (i32, i32, i32) {
    %c0_i32 = arith.constant 0 : i32
    %c0_i32_0 = arith.constant 0 : i32
    %c0_i32_1 = arith.constant 0 : i32
    return %arg0, %c0_i32, %c0_i32_0 : i32, i32, i32
  }
  func.func @transform_1(%arg0: i32, %arg1: i32) -> (i32, i32, i32) {
    %c0_i32 = arith.constant 0 : i32
    %c0_i32_0 = arith.constant 0 : i32
    return %arg0, %c0_i32, %arg1 : i32, i32, i32
  }
  func.func @transform_2(%arg0: i32, %arg1: i32) -> (i32, i32, i32) {
    %c0_i32 = arith.constant 0 : i32
    %c0_i32_0 = arith.constant 0 : i32
    return %arg0, %c0_i32, %arg1 : i32, i32, i32
  }
  func.func @transform_3(%arg0: i32, %arg1: i32) -> (i32, i32, i32, i32) {
    %c0_i32 = arith.constant 0 : i32
    %c0_i32_0 = arith.constant 0 : i32
    %c0_i32_1 = arith.constant 0 : i32
    return %arg0, %arg1, %c0_i32, %c0_i32_0 : i32, i32, i32, i32
  }
  func.func @transform_4(%arg0: i32, %arg1: i32) -> (i32, i32, i32, i32) {
    %c0_i32 = arith.constant 0 : i32
    %c0_i32_0 = arith.constant 0 : i32
    %c0_i32_1 = arith.constant 0 : i32
    return %arg0, %arg1, %c0_i32, %c0_i32_0 : i32, i32, i32, i32
  }
}

module attributes {stable_mosaic.version = 11 : i64} {
  func.func @_bn_affine_add_kernel(%arg0: i32, %arg1: memref<8x128xf32, #tpu.memory_space<vmem>>, %arg2: memref<8x128xf32, #tpu.memory_space<vmem>>, %arg3: memref<8x1xf32, #tpu.memory_space<vmem>>, %arg4: memref<8x1xf32, #tpu.memory_space<vmem>>, %arg5: memref<8x1xf32, #tpu.memory_space<vmem>>, %arg6: memref<8x1xf32, #tpu.memory_space<vmem>>, %arg7: memref<8x128xf32, #tpu.memory_space<vmem>>) attributes {dimension_semantics = [#tpu.dimension_semantics<parallel>], iteration_bounds = array<i64: 1>, scalar_prefetch = 0 : i64, scratch_operands = 0 : i64, tpu.core_type = #tpu.core_type<tc>, window_params = [{transform_indices = @transform_0, window_bounds = array<i64: 8, 128>}, {transform_indices = @transform_1, window_bounds = array<i64: 8, 128>}, {pipeline_mode = #tpu.pipeline_mode<synchronous>, transform_indices = @transform_2, window_bounds = array<i64: 8, 1>}, {pipeline_mode = #tpu.pipeline_mode<synchronous>, transform_indices = @transform_3, window_bounds = array<i64: 8, 1>}, {pipeline_mode = #tpu.pipeline_mode<synchronous>, transform_indices = @transform_4, window_bounds = array<i64: 8, 1>}, {pipeline_mode = #tpu.pipeline_mode<synchronous>, transform_indices = @transform_5, window_bounds = array<i64: 8, 1>}, {transform_indices = @transform_6, window_bounds = array<i64: 8, 128>}]} {
    %c0 = arith.constant 0 : index
    %c0_0 = arith.constant 0 : index
    %0 = vector.load %arg1[%c0, %c0_0] : memref<8x128xf32, #tpu.memory_space<vmem>>, vector<8x128xf32>
    %c0_1 = arith.constant 0 : index
    %c0_2 = arith.constant 0 : index
    %1 = vector.load %arg3[%c0_1, %c0_2] : memref<8x1xf32, #tpu.memory_space<vmem>>, vector<8x1xf32>
    %2 = vector.broadcast %1 : vector<8x1xf32> to vector<8x128xf32>
    %3 = arith.mulf %0, %2 : vector<8x128xf32>
    %c0_3 = arith.constant 0 : index
    %c0_4 = arith.constant 0 : index
    %4 = vector.load %arg4[%c0_3, %c0_4] : memref<8x1xf32, #tpu.memory_space<vmem>>, vector<8x1xf32>
    %5 = vector.broadcast %4 : vector<8x1xf32> to vector<8x128xf32>
    %6 = arith.addf %3, %5 : vector<8x128xf32>
    %c0_5 = arith.constant 0 : index
    %c0_6 = arith.constant 0 : index
    %7 = vector.load %arg2[%c0_5, %c0_6] : memref<8x128xf32, #tpu.memory_space<vmem>>, vector<8x128xf32>
    %c0_7 = arith.constant 0 : index
    %c0_8 = arith.constant 0 : index
    %8 = vector.load %arg5[%c0_7, %c0_8] : memref<8x1xf32, #tpu.memory_space<vmem>>, vector<8x1xf32>
    %9 = vector.broadcast %8 : vector<8x1xf32> to vector<8x128xf32>
    %10 = arith.mulf %7, %9 : vector<8x128xf32>
    %11 = arith.addf %6, %10 : vector<8x128xf32>
    %c0_9 = arith.constant 0 : index
    %c0_10 = arith.constant 0 : index
    %12 = vector.load %arg6[%c0_9, %c0_10] : memref<8x1xf32, #tpu.memory_space<vmem>>, vector<8x1xf32>
    %13 = vector.broadcast %12 : vector<8x1xf32> to vector<8x128xf32>
    %14 = arith.addf %11, %13 : vector<8x128xf32>
    %cst = arith.constant 0.000000e+00 : f32
    %15 = vector.broadcast %cst : f32 to vector<8x128xf32>
    %16 = arith.maximumf %14, %15 : vector<8x128xf32>
    %c0_11 = arith.constant 0 : index
    %c0_12 = arith.constant 0 : index
    %17 = vector.load %arg7[%c0_11, %c0_12] : memref<8x128xf32, #tpu.memory_space<vmem>>, vector<8x128xf32>
    tpu.vector_store %arg7[%c0_11, %c0_12], %16 {strides = array<i32>} : memref<8x128xf32, #tpu.memory_space<vmem>>, vector<8x128xf32>,
    return
  }
  func.func @transform_0(%arg0: i32) -> (i32, i32) {
    %c0_i32 = arith.constant 0 : i32
    %c0_i32_0 = arith.constant 0 : i32
    return %c0_i32, %arg0 : i32, i32
  }
  func.func @transform_1(%arg0: i32) -> (i32, i32) {
    %c0_i32 = arith.constant 0 : i32
    %c0_i32_0 = arith.constant 0 : i32
    return %c0_i32, %arg0 : i32, i32
  }
  func.func @transform_2(%arg0: i32) -> (i32, i32) {
    %c0_i32 = arith.constant 0 : i32
    %c0_i32_0 = arith.constant 0 : i32
    %c0_i32_1 = arith.constant 0 : i32
    return %c0_i32, %c0_i32_0 : i32, i32
  }
  func.func @transform_3(%arg0: i32) -> (i32, i32) {
    %c0_i32 = arith.constant 0 : i32
    %c0_i32_0 = arith.constant 0 : i32
    %c0_i32_1 = arith.constant 0 : i32
    return %c0_i32, %c0_i32_0 : i32, i32
  }
  func.func @transform_4(%arg0: i32) -> (i32, i32) {
    %c0_i32 = arith.constant 0 : i32
    %c0_i32_0 = arith.constant 0 : i32
    %c0_i32_1 = arith.constant 0 : i32
    return %c0_i32, %c0_i32_0 : i32, i32
  }
  func.func @transform_5(%arg0: i32) -> (i32, i32) {
    %c0_i32 = arith.constant 0 : i32
    %c0_i32_0 = arith.constant 0 : i32
    %c0_i32_1 = arith.constant 0 : i32
    return %c0_i32, %c0_i32_0 : i32, i32
  }
  func.func @transform_6(%arg0: i32) -> (i32, i32) {
    %c0_i32 = arith.constant 0 : i32
    %c0_i32_0 = arith.constant 0 : i32
    return %c0_i32, %arg0 : i32, i32
  }
}

module attributes {stable_mosaic.version = 11 : i64} {
  func.func @_conv_bn_kernel_1k(%arg0: i32, %arg1: i32, %arg2: memref<1x8x32xf32, #tpu.memory_space<vmem>>, %arg3: memref<1x32x128xf32, #tpu.memory_space<vmem>>, %arg4: memref<1x8x128xf32, #tpu.memory_space<vmem>>, %arg5: memref<1x1x8x1xf32, #tpu.memory_space<vmem>>, %arg6: memref<1x1x8x1xf32, #tpu.memory_space<vmem>>) attributes {dimension_semantics = [#tpu.dimension_semantics<parallel>, #tpu.dimension_semantics<parallel>], iteration_bounds = array<i64: 1, 1>, scalar_prefetch = 0 : i64, scratch_operands = 0 : i64, tpu.core_type = #tpu.core_type<tc>, window_params = [{transform_indices = @transform_0, window_bounds = array<i64: 1, 8, 32>}, {transform_indices = @transform_1, window_bounds = array<i64: 1, 32, 128>}, {transform_indices = @transform_2, window_bounds = array<i64: 1, 8, 128>}, {transform_indices = @transform_3, window_bounds = array<i64: 1, 1, 8, 1>}, {transform_indices = @transform_4, window_bounds = array<i64: 1, 1, 8, 1>}]} {
    %c0 = arith.constant 0 : index
    %c0_0 = arith.constant 0 : index
    %c0_1 = arith.constant 0 : index
    %0 = vector.load %arg2[%c0, %c0_0, %c0_1] : memref<1x8x32xf32, #tpu.memory_space<vmem>>, vector<1x8x32xf32>
    %1 = vector.shape_cast %0 : vector<1x8x32xf32> to vector<8x32xf32>
    %c0_2 = arith.constant 0 : index
    %c0_3 = arith.constant 0 : index
    %c0_4 = arith.constant 0 : index
    %2 = vector.load %arg3[%c0_2, %c0_3, %c0_4] : memref<1x32x128xf32, #tpu.memory_space<vmem>>, vector<1x32x128xf32>
    %3 = vector.shape_cast %2 : vector<1x32x128xf32> to vector<32x128xf32>
    %cst = arith.constant dense<0.000000e+00> : vector<8x128xf32>
    %4 = tpu.matmul %1, %3, %cst {dimension_numbers = #tpu.dot_dimension_numbers<[1], [0], [0], [1], [0, 0, 1, 1], [], []>} : vector<8x32xf32>, vector<32x128xf32>, vector<8x128xf32> -> vector<8x128xf32>
    %c0_5 = arith.constant 0 : index
    %c0_6 = arith.constant 0 : index
    %c0_7 = arith.constant 0 : index
    %5 = vector.load %arg4[%c0_5, %c0_6, %c0_7] : memref<1x8x128xf32, #tpu.memory_space<vmem>>, vector<1x8x128xf32>
    %6 = vector.shape_cast %5 : vector<1x8x128xf32> to vector<8x128xf32>
    %7 = vector.shape_cast %4 : vector<8x128xf32> to vector<1x8x128xf32>
    tpu.vector_store %arg4[%c0_5, %c0_6, %c0_7], %7 {strides = array<i32>} : memref<1x8x128xf32, #tpu.memory_space<vmem>>, vector<1x8x128xf32>,
    %cst_8 = arith.constant dense<0.000000e+00> : vector<8xf32>
    %8 = vector.multi_reduction <add>, %4, %cst_8 [1] : vector<8x128xf32> to vector<8xf32>
    %9 = vector.shape_cast %8 : vector<8xf32> to vector<8x1xf32>
    %c0_9 = arith.constant 0 : index
    %c0_10 = arith.constant 0 : index
    %c0_11 = arith.constant 0 : index
    %c0_12 = arith.constant 0 : index
    %10 = vector.load %arg5[%c0_9, %c0_10, %c0_11, %c0_12] : memref<1x1x8x1xf32, #tpu.memory_space<vmem>>, vector<1x1x8x1xf32>
    %11 = vector.shape_cast %10 : vector<1x1x8x1xf32> to vector<8x1xf32>
    %12 = vector.shape_cast %9 : vector<8x1xf32> to vector<1x1x8x1xf32>
    tpu.vector_store %arg5[%c0_9, %c0_10, %c0_11, %c0_12], %12 {strides = array<i32>} : memref<1x1x8x1xf32, #tpu.memory_space<vmem>>, vector<1x1x8x1xf32>,
    %13 = arith.mulf %4, %4 : vector<8x128xf32>
    %cst_13 = arith.constant dense<0.000000e+00> : vector<8xf32>
    %14 = vector.multi_reduction <add>, %13, %cst_13 [1] : vector<8x128xf32> to vector<8xf32>
    %15 = vector.shape_cast %14 : vector<8xf32> to vector<8x1xf32>
    %c0_14 = arith.constant 0 : index
    %c0_15 = arith.constant 0 : index
    %c0_16 = arith.constant 0 : index
    %c0_17 = arith.constant 0 : index
    %16 = vector.load %arg6[%c0_14, %c0_15, %c0_16, %c0_17] : memref<1x1x8x1xf32, #tpu.memory_space<vmem>>, vector<1x1x8x1xf32>
    %17 = vector.shape_cast %16 : vector<1x1x8x1xf32> to vector<8x1xf32>
    %18 = vector.shape_cast %15 : vector<8x1xf32> to vector<1x1x8x1xf32>
    tpu.vector_store %arg6[%c0_14, %c0_15, %c0_16, %c0_17], %18 {strides = array<i32>} : memref<1x1x8x1xf32, #tpu.memory_space<vmem>>, vector<1x1x8x1xf32>,
    return
  }
  func.func @transform_0(%arg0: i32, %arg1: i32) -> (i32, i32, i32) {
    %c0_i32 = arith.constant 0 : i32
    %c0_i32_0 = arith.constant 0 : i32
    %c0_i32_1 = arith.constant 0 : i32
    return %arg0, %c0_i32, %c0_i32_0 : i32, i32, i32
  }
  func.func @transform_1(%arg0: i32, %arg1: i32) -> (i32, i32, i32) {
    %c0_i32 = arith.constant 0 : i32
    %c0_i32_0 = arith.constant 0 : i32
    return %arg0, %c0_i32, %arg1 : i32, i32, i32
  }
  func.func @transform_2(%arg0: i32, %arg1: i32) -> (i32, i32, i32) {
    %c0_i32 = arith.constant 0 : i32
    %c0_i32_0 = arith.constant 0 : i32
    return %arg0, %c0_i32, %arg1 : i32, i32, i32
  }
  func.func @transform_3(%arg0: i32, %arg1: i32) -> (i32, i32, i32, i32) {
    %c0_i32 = arith.constant 0 : i32
    %c0_i32_0 = arith.constant 0 : i32
    %c0_i32_1 = arith.constant 0 : i32
    return %arg0, %arg1, %c0_i32, %c0_i32_0 : i32, i32, i32, i32
  }
  func.func @transform_4(%arg0: i32, %arg1: i32) -> (i32, i32, i32, i32) {
    %c0_i32 = arith.constant 0 : i32
    %c0_i32_0 = arith.constant 0 : i32
    %c0_i32_1 = arith.constant 0 : i32
    return %arg0, %arg1, %c0_i32, %c0_i32_0 : i32, i32, i32, i32
  }
}

</mosaic_0001>

<llo_original>
// kernel: basic_block_forward.5
$region0: #{basic_block_forward.5}
  #allocation0 [shape = 'u32[]', space=smem, size = 0x4, offset = 0x4, fixed_abs, tag = 'smem constant byte address 0x4 - core index']
  #allocation1 [shape = 'u32[72,128]{1,0:T(1,128)}', space=vmem, size = 0x9000, scoped, tag = 'internal scratch']
  %s0 = inlined_call_operand.vmem [shape: f32[1,8,80], index: 0, kind: input, shape index: {}]
  %s1 = inlined_call_operand.vmem [shape: f32[1,80,128], index: 1, kind: input, shape index: {}]
  %s2 = inlined_call_operand.vmem [shape: f32[1,8,128], index: 2, kind: output, shape index: {0}]
  %s3 = inlined_call_operand.vmem [shape: f32[1,1,8,1], index: 3, kind: output, shape index: {1}]
  %s4 = inlined_call_operand.vmem [shape: f32[1,1,8,1], index: 4, kind: output, shape index: {2}]
  %5 = xla_tuple %s2, %s3, %s4
  %s6 = sld [smem:[#allocation0]]
  $region34: #{basic_block_forward.5} parent=0
    _
  %s8 = ssub.s32 1, %s6
  %s9 = scalar_select 0, %s8, %s6
  // Predicated region
  $region2: #{basic_block_forward.5} parent=0 // pred_check
    _
  $region3: #{basic_block_forward.5} parent=0 // pred_check_branch
    %11 = sbr.rel (0) target = $region5
  $region4: #{basic_block_forward.5} parent=0 // pred_region
    _
  $region5: #{basic_block_forward.5} parent=0 // pred_fallthru
    _
  // Predicated region
  $region6: #{basic_block_forward.5} parent=0 // pred_check
    _
  $region7: #{basic_block_forward.5} parent=0 // pred_check_branch
    %13 = sbr.rel (0) target = $region9
  $region8: #{basic_block_forward.5} parent=0 // pred_region
    _
  $region9: #{basic_block_forward.5} parent=0 // pred_fallthru
    _
  %v14 = vld [vmem:[%s0] sm:$0xff]
  %v15 = vld [vmem:[%s1] sm:$0xff]
  %v16 = vld [vmem:[%s1 + $0x8] sm:$0xff]
  %v17 = vld [vmem:[%s1 + $0x10] sm:$0xff]
  %v18 = vld [vmem:[%s1 + $0x18] sm:$0xff]
  %v19 = vld [vmem:[%s1 + $0x20] sm:$0xff]
  %v20 = vld [vmem:[%s1 + $0x28] sm:$0xff]
  %v21 = vld [vmem:[%s1 + $0x30] sm:$0xff]
  %v22 = vld [vmem:[%s1 + $0x38] sm:$0xff]
  %v23 = vld [vmem:[%s1 + $0x40] sm:$0xff]
  %v24 = vld [vmem:[%s1 + $0x48] sm:$0xff]
  %vm25 = vcmask 654336
  %v27 = vsel %vm25, %v14, 0
  %29 = vmatpush.msra.mxu0 0.0
  %30 = vmatpush.msra.mxu0 0.0
  %31 = vmatpush.msra.mxu0 0.0
  %32 = vmatpush.msra.mxu0 0.0
  %33 = vmatpush.msra.mxu0 0.0
  %34 = vmatpush.msra.mxu0 0.0
  %35 = vmatpush.msra.mxu0 %v24
  %36 = vmatpush.msra.mxu0 %v23
  %37 = vmatpush.msra.mxu0 %v22
  %38 = vmatpush.msra.mxu0 %v21
  %39 = vmatpush.msra.mxu0 %v20
  %40 = vmatpush.msra.mxu0 %v19
  %41 = vmatpush.msra.mxu0 %v18
  %42 = vmatpush.msra.mxu0 %v17
  %43 = vmatpush.msra.mxu0 %v16
  %44 = vmatpush.msra.mxu0 %v15
  %45 = vmatmul.f32.gmra.mxu0 %v27
  %v46 = vpop.f32.mrf.mxu0
  %v47 = vadd.f32 0.0, %v46
  %48 = vdwg.mxu0
  %49 = vst [vmem:[%s2] sm:$0xff] %v47
  %50 = vadd.xlane.f32.xlu0 %v47
  %v51 = vpop.xlane.xlu0 %50
  %vm52 = vcmask 7168
  %53 = vst.msk [vmem:[%s3] sm:$0xff] %vm52, %v51
  %v54 = vmul.f32 %v47, %v47
  %55 = vadd.xlane.f32.xlu0 %v54
  %v56 = vpop.xlane.xlu0 %55
  %57 = vst.msk [vmem:[%s4] sm:$0xff] %vm52, %v56
  // Predicated region
  $region10: #{basic_block_forward.5} parent=0 // pred_check
    _
  $region11: #{basic_block_forward.5} parent=0 // pred_check_branch
    %59 = sbr.rel (0) target = $region13
  $region12: #{basic_block_forward.5} parent=0 // pred_region
    _
  $region13: #{basic_block_forward.5} parent=0 // pred_fallthru
    _
  // Predicated region
  $region14: #{basic_block_forward.5} parent=0 // pred_check
    _
  $region15: #{basic_block_forward.5} parent=0 // pred_check_branch
    %61 = sbr.rel (0) target = $region17
  $region16: #{basic_block_forward.5} parent=0 // pred_region
    _
  $region17: #{basic_block_forward.5} parent=0 // pred_fallthru
    _
  // Predicated region
  $region18: #{basic_block_forward.5} parent=0 // pred_check
    _
  $region19: #{basic_block_forward.5} parent=0 // pred_check_branch
    %63 = sbr.rel (0) target = $region21
  $region20: #{basic_block_forward.5} parent=0 // pred_region
    _
  $region21: #{basic_block_forward.5} parent=0 // pred_fallthru
    _
  // Predicated region
  $region22: #{basic_block_forward.5} parent=0 // pred_check
    _
  $region23: #{basic_block_forward.5} parent=0 // pred_check_branch
    %65 = sbr.rel (0) target = $region25
  $region24: #{basic_block_forward.5} parent=0 // pred_region
    _
  $region25: #{basic_block_forward.5} parent=0 // pred_fallthru
    _
  // Predicated region
  $region26: #{basic_block_forward.5} parent=0 // pred_check
    _
  $region27: #{basic_block_forward.5} parent=0 // pred_check_branch
    %67 = sbr.rel (0) target = $region29
  $region28: #{basic_block_forward.5} parent=0 // pred_region
    _
  $region29: #{basic_block_forward.5} parent=0 // pred_fallthru
    _
  // Predicated region
  $region30: #{basic_block_forward.5} parent=0 // pred_check
    _
  $region31: #{basic_block_forward.5} parent=0 // pred_check_branch
    %69 = sbr.rel (0) target = $region33
  $region32: #{basic_block_forward.5} parent=0 // pred_region
    _
  $region33: #{basic_block_forward.5} parent=0 // pred_fallthru
    _

// kernel: basic_block_forward.6
$region0: #{basic_block_forward.6}
  #allocation0 [shape = 'u32[]', space=smem, size = 0x4, offset = 0x4, fixed_abs, tag = 'smem constant byte address 0x4 - core index']
  #allocation1 [shape = 'u32[72,128]{1,0:T(1,128)}', space=vmem, size = 0x9000, scoped, tag = 'internal scratch']
  %s0 = inlined_call_operand.vmem [shape: f32[8,128], index: 0, kind: input, shape index: {}]
  %s1 = inlined_call_operand.vmem [shape: f32[8,1], index: 1, kind: input, shape index: {}]
  %s2 = inlined_call_operand.vmem [shape: f32[8,1], index: 2, kind: input, shape index: {}]
  %s3 = inlined_call_operand.vmem [shape: f32[8,128], index: 3, kind: output, shape index: {}]
  %s4 = sld [smem:[#allocation0]]
  $region22: #{basic_block_forward.6} parent=0
    _
  %s6 = ssub.s32 1, %s4
  %s7 = scalar_select 0, %s6, %s4
  // Predicated region
  $region2: #{basic_block_forward.6} parent=0 // pred_check
    _
  $region3: #{basic_block_forward.6} parent=0 // pred_check_branch
    %9 = sbr.rel (0) target = $region5
  $region4: #{basic_block_forward.6} parent=0 // pred_region
    _
  $region5: #{basic_block_forward.6} parent=0 // pred_fallthru
    _
  // Predicated region
  $region6: #{basic_block_forward.6} parent=0 // pred_check
    _
  $region7: #{basic_block_forward.6} parent=0 // pred_check_branch
    %11 = sbr.rel (0) target = $region9
  $region8: #{basic_block_forward.6} parent=0 // pred_region
    _
  $region9: #{basic_block_forward.6} parent=0 // pred_fallthru
    _
  // Predicated region
  $region10: #{basic_block_forward.6} parent=0 // pred_check
    _
  $region11: #{basic_block_forward.6} parent=0 // pred_check_branch
    %13 = sbr.rel (0) target = $region13
  $region12: #{basic_block_forward.6} parent=0 // pred_region
    _
  $region13: #{basic_block_forward.6} parent=0 // pred_fallthru
    _
  %v14 = vld [vmem:[%s0] sm:$0xff]
  %v15 = vld [vmem:[%s1] sm:$0xff]
  %17 = vset.pattern.permute.xlu0 0
  %18 = vperm.xlu0 %17, %v15
  %v19 = vpop.permute.xlu0 %18
  %v21 = vmul.f32 %v14, %v19
  %v22 = vld [vmem:[%s2] sm:$0xff]
  %24 = vset.pattern.permute.xlu0 0
  %25 = vperm.xlu0 %24, %v22
  %v26 = vpop.permute.xlu0 %25
  %v28 = vadd.f32 %v21, %v26
  %v29 = vmax.f32 %v28, 0.0
  %30 = vst [vmem:[%s3] sm:$0xff] %v29
  // Predicated region
  $region14: #{basic_block_forward.6} parent=0 // pred_check
    _
  $region15: #{basic_block_forward.6} parent=0 // pred_check_branch
    %32 = sbr.rel (0) target = $region17
  $region16: #{basic_block_forward.6} parent=0 // pred_region
    _
  $region17: #{basic_block_forward.6} parent=0 // pred_fallthru
    _
  // Predicated region
  $region18: #{basic_block_forward.6} parent=0 // pred_check
    _
  $region19: #{basic_block_forward.6} parent=0 // pred_check_branch
    %34 = sbr.rel (0) target = $region21
  $region20: #{basic_block_forward.6} parent=0 // pred_region
    _
  $region21: #{basic_block_forward.6} parent=0 // pred_fallthru
    _

// kernel: basic_block_forward.7
$region0: #{basic_block_forward.7}
  #allocation0 [shape = 'u32[]', space=smem, size = 0x4, offset = 0x4, fixed_abs, tag = 'smem constant byte address 0x4 - core index']
  #allocation1 [shape = 'u32[72,128]{1,0:T(1,128)}', space=vmem, size = 0x9000, scoped, tag = 'internal scratch']
  %s0 = inlined_call_operand.vmem [shape: f32[1,8,96], index: 0, kind: input, shape index: {}]
  %s1 = inlined_call_operand.vmem [shape: f32[1,96,128], index: 1, kind: input, shape index: {}]
  %s2 = inlined_call_operand.vmem [shape: f32[1,8,128], index: 2, kind: output, shape index: {0}]
  %s3 = inlined_call_operand.vmem [shape: f32[1,1,8,1], index: 3, kind: output, shape index: {1}]
  %s4 = inlined_call_operand.vmem [shape: f32[1,1,8,1], index: 4, kind: output, shape index: {2}]
  %5 = xla_tuple %s2, %s3, %s4
  %s6 = sld [smem:[#allocation0]]
  $region34: #{basic_block_forward.7} parent=0
    _
  %s8 = ssub.s32 1, %s6
  %s9 = scalar_select 0, %s8, %s6
  // Predicated region
  $region2: #{basic_block_forward.7} parent=0 // pred_check
    _
  $region3: #{basic_block_forward.7} parent=0 // pred_check_branch
    %11 = sbr.rel (0) target = $region5
  $region4: #{basic_block_forward.7} parent=0 // pred_region
    _
  $region5: #{basic_block_forward.7} parent=0 // pred_fallthru
    _
  // Predicated region
  $region6: #{basic_block_forward.7} parent=0 // pred_check
    _
  $region7: #{basic_block_forward.7} parent=0 // pred_check_branch
    %13 = sbr.rel (0) target = $region9
  $region8: #{basic_block_forward.7} parent=0 // pred_region
    _
  $region9: #{basic_block_forward.7} parent=0 // pred_fallthru
    _
  %v14 = vld [vmem:[%s0] sm:$0xff]
  %v15 = vld [vmem:[%s1] sm:$0xff]
  %v16 = vld [vmem:[%s1 + $0x8] sm:$0xff]
  %v17 = vld [vmem:[%s1 + $0x10] sm:$0xff]
  %v18 = vld [vmem:[%s1 + $0x18] sm:$0xff]
  %v19 = vld [vmem:[%s1 + $0x20] sm:$0xff]
  %v20 = vld [vmem:[%s1 + $0x28] sm:$0xff]
  %v21 = vld [vmem:[%s1 + $0x30] sm:$0xff]
  %v22 = vld [vmem:[%s1 + $0x38] sm:$0xff]
  %v23 = vld [vmem:[%s1 + $0x40] sm:$0xff]
  %v24 = vld [vmem:[%s1 + $0x48] sm:$0xff]
  %v25 = vld [vmem:[%s1 + $0x50] sm:$0xff]
  %v26 = vld [vmem:[%s1 + $0x58] sm:$0xff]
  %vm27 = vcmask 785408
  %v29 = vsel %vm27, %v14, 0
  %31 = vmatpush.msra.mxu0 0.0
  %32 = vmatpush.msra.mxu0 0.0
  %33 = vmatpush.msra.mxu0 0.0
  %34 = vmatpush.msra.mxu0 0.0
  %35 = vmatpush.msra.mxu0 %v26
  %36 = vmatpush.msra.mxu0 %v25
  %37 = vmatpush.msra.mxu0 %v24
  %38 = vmatpush.msra.mxu0 %v23
  %39 = vmatpush.msra.mxu0 %v22
  %40 = vmatpush.msra.mxu0 %v21
  %41 = vmatpush.msra.mxu0 %v20
  %42 = vmatpush.msra.mxu0 %v19
  %43 = vmatpush.msra.mxu0 %v18
  %44 = vmatpush.msra.mxu0 %v17
  %45 = vmatpush.msra.mxu0 %v16
  %46 = vmatpush.msra.mxu0 %v15
  %47 = vmatmul.f32.gmra.mxu0 %v29
  %v48 = vpop.f32.mrf.mxu0
  %v49 = vadd.f32 0.0, %v48
  %50 = vdwg.mxu0
  %51 = vst [vmem:[%s2] sm:$0xff] %v49
  %52 = vadd.xlane.f32.xlu0 %v49
  %v53 = vpop.xlane.xlu0 %52
  %vm54 = vcmask 7168
  %55 = vst.msk [vmem:[%s3] sm:$0xff] %vm54, %v53
  %v56 = vmul.f32 %v49, %v49
  %57 = vadd.xlane.f32.xlu0 %v56
  %v58 = vpop.xlane.xlu0 %57
  %59 = vst.msk [vmem:[%s4] sm:$0xff] %vm54, %v58
  // Predicated region
  $region10: #{basic_block_forward.7} parent=0 // pred_check
    _
  $region11: #{basic_block_forward.7} parent=0 // pred_check_branch
    %61 = sbr.rel (0) target = $region13
  $region12: #{basic_block_forward.7} parent=0 // pred_region
    _
  $region13: #{basic_block_forward.7} parent=0 // pred_fallthru
    _
  // Predicated region
  $region14: #{basic_block_forward.7} parent=0 // pred_check
    _
  $region15: #{basic_block_forward.7} parent=0 // pred_check_branch
    %63 = sbr.rel (0) target = $region17
  $region16: #{basic_block_forward.7} parent=0 // pred_region
    _
  $region17: #{basic_block_forward.7} parent=0 // pred_fallthru
    _
  // Predicated region
  $region18: #{basic_block_forward.7} parent=0 // pred_check
    _
  $region19: #{basic_block_forward.7} parent=0 // pred_check_branch
    %65 = sbr.rel (0) target = $region21
  $region20: #{basic_block_forward.7} parent=0 // pred_region
    _
  $region21: #{basic_block_forward.7} parent=0 // pred_fallthru
    _
  // Predicated region
  $region22: #{basic_block_forward.7} parent=0 // pred_check
    _
  $region23: #{basic_block_forward.7} parent=0 // pred_check_branch
    %67 = sbr.rel (0) target = $region25
  $region24: #{basic_block_forward.7} parent=0 // pred_region
    _
  $region25: #{basic_block_forward.7} parent=0 // pred_fallthru
    _
  // Predicated region
  $region26: #{basic_block_forward.7} parent=0 // pred_check
    _
  $region27: #{basic_block_forward.7} parent=0 // pred_check_branch
    %69 = sbr.rel (0) target = $region29
  $region28: #{basic_block_forward.7} parent=0 // pred_region
    _
  $region29: #{basic_block_forward.7} parent=0 // pred_fallthru
    _
  // Predicated region
  $region30: #{basic_block_forward.7} parent=0 // pred_check
    _
  $region31: #{basic_block_forward.7} parent=0 // pred_check_branch
    %71 = sbr.rel (0) target = $region33
  $region32: #{basic_block_forward.7} parent=0 // pred_region
    _
  $region33: #{basic_block_forward.7} parent=0 // pred_fallthru
    _

// kernel: basic_block_forward.9
$region0: #{basic_block_forward.9}
  #allocation0 [shape = 'u32[]', space=smem, size = 0x4, offset = 0x4, fixed_abs, tag = 'smem constant byte address 0x4 - core index']
  #allocation1 [shape = 'u32[72,128]{1,0:T(1,128)}', space=vmem, size = 0x9000, scoped, tag = 'internal scratch']
  %s0 = inlined_call_operand.vmem [shape: f32[8,128], index: 0, kind: input, shape index: {}]
  %s1 = inlined_call_operand.vmem [shape: f32[8,128], index: 1, kind: input, shape index: {}]
  %s2 = inlined_call_operand.vmem [shape: f32[8,1], index: 2, kind: input, shape index: {}]
  %s3 = inlined_call_operand.vmem [shape: f32[8,1], index: 3, kind: input, shape index: {}]
  %s4 = inlined_call_operand.vmem [shape: f32[8,1], index: 4, kind: input, shape index: {}]
  %s5 = inlined_call_operand.vmem [shape: f32[8,1], index: 5, kind: input, shape index: {}]
  %s6 = inlined_call_operand.vmem [shape: f32[8,128], index: 6, kind: output, shape index: {}]
  %s7 = sld [smem:[#allocation0]]
  $region34: #{basic_block_forward.9} parent=0
    _
  %s9 = ssub.s32 1, %s7
  %s10 = scalar_select 0, %s9, %s7
  // Predicated region
  $region2: #{basic_block_forward.9} parent=0 // pred_check
    _
  $region3: #{basic_block_forward.9} parent=0 // pred_check_branch
    %12 = sbr.rel (0) target = $region5
  $region4: #{basic_block_forward.9} parent=0 // pred_region
    _
  $region5: #{basic_block_forward.9} parent=0 // pred_fallthru
    _
  // Predicated region
  $region6: #{basic_block_forward.9} parent=0 // pred_check
    _
  $region7: #{basic_block_forward.9} parent=0 // pred_check_branch
    %14 = sbr.rel (0) target = $region9
  $region8: #{basic_block_forward.9} parent=0 // pred_region
    _
  $region9: #{basic_block_forward.9} parent=0 // pred_fallthru
    _
  // Predicated region
  $region10: #{basic_block_forward.9} parent=0 // pred_check
    _
  $region11: #{basic_block_forward.9} parent=0 // pred_check_branch
    %16 = sbr.rel (0) target = $region13
  $region12: #{basic_block_forward.9} parent=0 // pred_region
    _
  $region13: #{basic_block_forward.9} parent=0 // pred_fallthru
    _
  // Predicated region
  $region14: #{basic_block_forward.9} parent=0 // pred_check
    _
  $region15: #{basic_block_forward.9} parent=0 // pred_check_branch
    %18 = sbr.rel (0) target = $region17
  $region16: #{basic_block_forward.9} parent=0 // pred_region
    _
  $region17: #{basic_block_forward.9} parent=0 // pred_fallthru
    _
  // Predicated region
  $region18: #{basic_block_forward.9} parent=0 // pred_check
    _
  $region19: #{basic_block_forward.9} parent=0 // pred_check_branch
    %20 = sbr.rel (0) target = $region21
  $region20: #{basic_block_forward.9} parent=0 // pred_region
    _
  $region21: #{basic_block_forward.9} parent=0 // pred_fallthru
    _
  // Predicated region
  $region22: #{basic_block_forward.9} parent=0 // pred_check
    _
  $region23: #{basic_block_forward.9} parent=0 // pred_check_branch
    %22 = sbr.rel (0) target = $region25
  $region24: #{basic_block_forward.9} parent=0 // pred_region
    _
  $region25: #{basic_block_forward.9} parent=0 // pred_fallthru
    _
  %v23 = vld [vmem:[%s0] sm:$0xff]
  %v24 = vld [vmem:[%s2] sm:$0xff]
  %26 = vset.pattern.permute.xlu0 0
  %27 = vperm.xlu0 %26, %v24
  %v28 = vpop.permute.xlu0 %27
  %v30 = vmul.f32 %v23, %v28
  %v31 = vld [vmem:[%s3] sm:$0xff]
  %33 = vset.pattern.permute.xlu0 0
  %34 = vperm.xlu0 %33, %v31
  %v35 = vpop.permute.xlu0 %34
  %v37 = vadd.f32 %v30, %v35
  %v38 = vld [vmem:[%s1] sm:$0xff]
  %v39 = vld [vmem:[%s4] sm:$0xff]
  %41 = vset.pattern.permute.xlu0 0
  %42 = vperm.xlu0 %41, %v39
  %v43 = vpop.permute.xlu0 %42
  %v45 = vmul.f32 %v38, %v43
  %v46 = vadd.f32 %v37, %v45
  %v47 = vld [vmem:[%s5] sm:$0xff]
  %49 = vset.pattern.permute.xlu0 0
  %50 = vperm.xlu0 %49, %v47
  %v51 = vpop.permute.xlu0 %50
  %v53 = vadd.f32 %v46, %v51
  %v54 = vmax.f32 %v53, 0.0
  %55 = vst [vmem:[%s6] sm:$0xff] %v54
  // Predicated region
  $region26: #{basic_block_forward.9} parent=0 // pred_check
    _
  $region27: #{basic_block_forward.9} parent=0 // pred_check_branch
    %57 = sbr.rel (0) target = $region29
  $region28: #{basic_block_forward.9} parent=0 // pred_region
    _
  $region29: #{basic_block_forward.9} parent=0 // pred_fallthru
    _
  // Predicated region
  $region30: #{basic_block_forward.9} parent=0 // pred_check
    _
  $region31: #{basic_block_forward.9} parent=0 // pred_check_branch
    %59 = sbr.rel (0) target = $region33
  $region32: #{basic_block_forward.9} parent=0 // pred_region
    _
  $region33: #{basic_block_forward.9} parent=0 // pred_fallthru
    _

// kernel: basic_block_forward.8
$region0: #{basic_block_forward.8}
  #allocation0 [shape = 'u32[]', space=smem, size = 0x4, offset = 0x4, fixed_abs, tag = 'smem constant byte address 0x4 - core index']
  #allocation1 [shape = 'u32[72,128]{1,0:T(1,128)}', space=vmem, size = 0x9000, scoped, tag = 'internal scratch']
  %s0 = inlined_call_operand.vmem [shape: f32[1,8,32], index: 0, kind: input, shape index: {}]
  %s1 = inlined_call_operand.vmem [shape: f32[1,32,128], index: 1, kind: input, shape index: {}]
  %s2 = inlined_call_operand.vmem [shape: f32[1,8,128], index: 2, kind: output, shape index: {0}]
  %s3 = inlined_call_operand.vmem [shape: f32[1,1,8,1], index: 3, kind: output, shape index: {1}]
  %s4 = inlined_call_operand.vmem [shape: f32[1,1,8,1], index: 4, kind: output, shape index: {2}]
  %5 = xla_tuple %s2, %s3, %s4
  %s6 = sld [smem:[#allocation0]]
  $region34: #{basic_block_forward.8} parent=0
    _
  %s8 = ssub.s32 1, %s6
  %s9 = scalar_select 0, %s8, %s6
  // Predicated region
  $region2: #{basic_block_forward.8} parent=0 // pred_check
    _
  $region3: #{basic_block_forward.8} parent=0 // pred_check_branch
    %11 = sbr.rel (0) target = $region5
  $region4: #{basic_block_forward.8} parent=0 // pred_region
    _
  $region5: #{basic_block_forward.8} parent=0 // pred_fallthru
    _
  // Predicated region
  $region6: #{basic_block_forward.8} parent=0 // pred_check
    _
  $region7: #{basic_block_forward.8} parent=0 // pred_check_branch
    %13 = sbr.rel (0) target = $region9
  $region8: #{basic_block_forward.8} parent=0 // pred_region
    _
  $region9: #{basic_block_forward.8} parent=0 // pred_fallthru
    _
  %v14 = vld [vmem:[%s0] sm:$0xff]
  %v15 = vld [vmem:[%s1] sm:$0xff]
  %v16 = vld [vmem:[%s1 + $0x8] sm:$0xff]
  %v17 = vld [vmem:[%s1 + $0x10] sm:$0xff]
  %v18 = vld [vmem:[%s1 + $0x18] sm:$0xff]
  %vm19 = vcmask 261120
  %v21 = vsel %vm19, %v14, 0
  %23 = vmatpush.msra.mxu0 0.0
  %24 = vmatpush.msra.mxu0 0.0
  %25 = vmatpush.msra.mxu0 0.0
  %26 = vmatpush.msra.mxu0 0.0
  %27 = vmatpush.msra.mxu0 0.0
  %28 = vmatpush.msra.mxu0 0.0
  %29 = vmatpush.msra.mxu0 0.0
  %30 = vmatpush.msra.mxu0 0.0
  %31 = vmatpush.msra.mxu0 0.0
  %32 = vmatpush.msra.mxu0 0.0
  %33 = vmatpush.msra.mxu0 0.0
  %34 = vmatpush.msra.mxu0 0.0
  %35 = vmatpush.msra.mxu0 %v18
  %36 = vmatpush.msra.mxu0 %v17
  %37 = vmatpush.msra.mxu0 %v16
  %38 = vmatpush.msra.mxu0 %v15
  %39 = vmatmul.f32.gmra.mxu0 %v21
  %v40 = vpop.f32.mrf.mxu0
  %v41 = vadd.f32 0.0, %v40
  %42 = vdwg.mxu0
  %43 = vst [vmem:[%s2] sm:$0xff] %v41
  %44 = vadd.xlane.f32.xlu0 %v41
  %v45 = vpop.xlane.xlu0 %44
  %vm46 = vcmask 7168
  %47 = vst.msk [vmem:[%s3] sm:$0xff] %vm46, %v45
  %v48 = vmul.f32 %v41, %v41
  %49 = vadd.xlane.f32.xlu0 %v48
  %v50 = vpop.xlane.xlu0 %49
  %51 = vst.msk [vmem:[%s4] sm:$0xff] %vm46, %v50
  // Predicated region
  $region10: #{basic_block_forward.8} parent=0 // pred_check
    _
  $region11: #{basic_block_forward.8} parent=0 // pred_check_branch
    %53 = sbr.rel (0) target = $region13
  $region12: #{basic_block_forward.8} parent=0 // pred_region
    _
  $region13: #{basic_block_forward.8} parent=0 // pred_fallthru
    _
  // Predicated region
  $region14: #{basic_block_forward.8} parent=0 // pred_check
    _
  $region15: #{basic_block_forward.8} parent=0 // pred_check_branch
    %55 = sbr.rel (0) target = $region17
  $region16: #{basic_block_forward.8} parent=0 // pred_region
    _
  $region17: #{basic_block_forward.8} parent=0 // pred_fallthru
    _
  // Predicated region
  $region18: #{basic_block_forward.8} parent=0 // pred_check
    _
  $region19: #{basic_block_forward.8} parent=0 // pred_check_branch
    %57 = sbr.rel (0) target = $region21
  $region20: #{basic_block_forward.8} parent=0 // pred_region
    _
  $region21: #{basic_block_forward.8} parent=0 // pred_fallthru
    _
  // Predicated region
  $region22: #{basic_block_forward.8} parent=0 // pred_check
    _
  $region23: #{basic_block_forward.8} parent=0 // pred_check_branch
    %59 = sbr.rel (0) target = $region25
  $region24: #{basic_block_forward.8} parent=0 // pred_region
    _
  $region25: #{basic_block_forward.8} parent=0 // pred_fallthru
    _
  // Predicated region
  $region26: #{basic_block_forward.8} parent=0 // pred_check
    _
  $region27: #{basic_block_forward.8} parent=0 // pred_check_branch
    %61 = sbr.rel (0) target = $region29
  $region28: #{basic_block_forward.8} parent=0 // pred_region
    _
  $region29: #{basic_block_forward.8} parent=0 // pred_fallthru
    _
  // Predicated region
  $region30: #{basic_block_forward.8} parent=0 // pred_check
    _
  $region31: #{basic_block_forward.8} parent=0 // pred_check_branch
    %63 = sbr.rel (0) target = $region33
  $region32: #{basic_block_forward.8} parent=0 // pred_region
    _
  $region33: #{basic_block_forward.8} parent=0 // pred_fallthru
    _

</llo_original>
